<compile_context>
chip_gen: v5e
topology: v5e:2x2
jax: 0.10.0
libtpu: 0.0.40
codegen_flags: <defaults>
</compile_context>

<pallas_src>
import jax
import jax.numpy as jnp
from jax.experimental import pallas as pl
from jax.experimental.pallas import tpu as pltpu

HIDDEN = 100        # matches nn.Linear(input_dim, 100)
HIDDEN_PAD = 128    # padded to full lane width


def _round_up(n: int, m: int) -> int:
    return ((n + m - 1) // m) * m


# --------------------------------------------------------------------------
# Kernel
# --------------------------------------------------------------------------
def _mlp_kernel(x_ref, w1_ref, b1_ref, w2_ref, b2_ref, o_ref):
    # x_ref:  (TB, D)          VMEM, streamed per grid step
    # w1_ref: (D, 128)         VMEM, resident across grid steps
    # b1_ref: (1, 128)         VMEM, resident
    # w2_ref: (128, 1)         VMEM, resident
    # b2_ref: (1,)             SMEM scalar
    # o_ref:  (TB, 1)          VMEM output block
    x = x_ref[...]
    h = jnp.dot(x, w1_ref[...], preferred_element_type=jnp.float32)   # (TB, 128)
    h = jnp.maximum(h + b1_ref[...], 0.0)                             # bias + ReLU
    z = jnp.dot(h, w2_ref[...], preferred_element_type=jnp.float32)   # (TB, 1)
    z = z + b2_ref[0]
    o_ref[...] = jax.nn.sigmoid(z).astype(o_ref.dtype)


# --------------------------------------------------------------------------
# Wrapper
# --------------------------------------------------------------------------
def pad_params(w1, b1, w2, b2):
    """Zero-pad hidden dim 100 -> 128 (exact through ReLU + second dot).

    Call ONCE at param-load time; keeps the jitted forward to a single
    pallas_call with no per-call weight reshuffling.
    """
    D = w1.shape[0]
    w1p = jnp.zeros((D, HIDDEN_PAD), jnp.float32).at[:, :HIDDEN].set(
        jnp.asarray(w1, jnp.float32))
    b1p = jnp.zeros((1, HIDDEN_PAD), jnp.float32).at[:, :HIDDEN].set(
        jnp.reshape(jnp.asarray(b1, jnp.float32), (1, HIDDEN)))
    w2p = jnp.zeros((HIDDEN_PAD, 1), jnp.float32).at[:HIDDEN, :].set(
        jnp.reshape(jnp.asarray(w2, jnp.float32), (HIDDEN, 1)))
    b2s = jnp.reshape(jnp.asarray(b2, jnp.float32), (1,))
    return w1p, b1p, w2p, b2s


def _pick_block_b(B: int, D: int) -> int:
    """Batch tile: x block ~4 MiB, >=2 grid steps for big batches, <= batch."""
    target_bytes = 4 * 1024 * 1024
    tb = _round_up(max(1, target_bytes // (4 * D)), 128)
    tb = max(128, min(tb, 8192))
    if B > 256:
        # Let the ("parallel",) batch axis actually split across v7x's 2 TCs.
        tb = min(tb, _round_up(pl.cdiv(B, 2), 128))
    # Never allocate a block larger than the (sublane-rounded) batch.
    tb = min(tb, max(_round_up(B, 8), 8))
    return tb


@jax.jit
def binary_classifier_forward(x, w1p, b1p, w2p, b2s):
    """Forward pass of BinaryClassifierNN with pre-padded params.

    x:   (B, D) float32
    w1p: (D, 128)   zero-padded first Linear weight (in, out)
    b1p: (1, 128)   zero-padded first bias
    w2p: (128, 1)   zero-padded second Linear weight
    b2s: (1,)       second bias
    Returns (B, 1) float32 probabilities.
    """
    B, D = x.shape
    x = x.astype(jnp.float32)

    tb = _pick_block_b(B, D)
    grid = pl.cdiv(B, tb)          # last tile may be ragged; rows >= B discarded

    # VMEM budget: double-buffered x + out blocks, resident weights, headroom.
    needed = 2 * tb * D * 4 + 2 * tb * 4 + 2 * (D * HIDDEN_PAD * 4) + 64 * 1024
    vmem_limit = min(max(needed + (2 << 20), 32 << 20), 48 << 20)   # v7x-safe cap

    cost = pl.CostEstimate(
        flops=2 * B * D * HIDDEN_PAD + 2 * B * HIDDEN_PAD,
        transcendentals=B,                                   # sigmoid exp per row
        bytes_accessed=B * D * 4 + D * HIDDEN_PAD * 4 + HIDDEN_PAD * 8 + B * 4,
    )

    out = pl.pallas_call(
        _mlp_kernel,
        out_shape=jax.ShapeDtypeStruct((B, 1), jnp.float32),
        grid=(grid,),
        in_specs=[
            pl.BlockSpec((tb, D), lambda i: (i, 0)),                # x (streamed)
            pl.BlockSpec((D, HIDDEN_PAD), lambda i: (0, 0)),        # w1 (resident)
            pl.BlockSpec((1, HIDDEN_PAD), lambda i: (0, 0)),        # b1 (resident)
            pl.BlockSpec((HIDDEN_PAD, 1), lambda i: (0, 0)),        # w2 (resident)
            pl.BlockSpec(memory_space=pltpu.MemorySpace.SMEM),      # b2 scalar
        ],
        out_specs=pl.BlockSpec((tb, 1), lambda i: (i, 0)),          # (TB,1) column
        compiler_params=pltpu.CompilerParams(
            dimension_semantics=("parallel",),
            vmem_limit_bytes=int(vmem_limit),
        ),
        cost_estimate=cost,
    )(x, w1p, b1p, w2p, b2s)

    return out


# --------------------------------------------------------------------------
# Param init (matches torch.nn.Linear defaults) + demo
# --------------------------------------------------------------------------
def init_params(key, input_dim):
    """U(-1/sqrt(fan_in), 1/sqrt(fan_in)) init, matching torch.nn.Linear."""
    k1, k2, k3, k4 = jax.random.split(key, 4)
    bound1 = 1.0 / jnp.sqrt(jnp.float32(input_dim))
    bound2 = 1.0 / jnp.sqrt(jnp.float32(HIDDEN))
    w1 = jax.random.uniform(k1, (input_dim, HIDDEN), jnp.float32, -bound1, bound1)
    b1 = jax.random.uniform(k2, (1, HIDDEN), jnp.float32, -bound1, bound1)
    w2 = jax.random.uniform(k3, (HIDDEN, 1), jnp.float32, -bound2, bound2)
    b2 = jax.random.uniform(k4, (1, 1), jnp.float32, -bound2, bound2)
    return w1, b1, w2, b2


if __name__ == "__main__":
    key = jax.random.PRNGKey(0)
    kx, kp = jax.random.split(key)

    batch, input_dim = 8, 32
    x = jax.random.normal(kx, (batch, input_dim), dtype=jnp.float32)
    w1, b1, w2, b2 = init_params(kp, input_dim)

    # Pad weights once (outside the hot jitted forward).
    w1p, b1p, w2p, b2s = pad_params(w1, b1, w2, b2)

    out = binary_classifier_forward(x, w1p, b1p, w2p, b2s)
    out = jax.block_until_ready(out)

    # Pure-JAX reference (unpadded weights).
    h_ref = jnp.maximum(x @ w1 + b1, 0.0)
    ref = jax.nn.sigmoid(h_ref @ w2 + b2)
    assert out.shape == (batch, 1)
    assert jnp.allclose(out, ref, atol=1e-5, rtol=1e-5), (
        float(jnp.max(jnp.abs(out - ref))))

    print("KERNEL_OK")
</pallas_src>

<mosaic_0001>
module attributes {stable_mosaic.version = 11 : i64} {
  func.func @_mlp_kernel(%arg0: i32, %arg1: memref<8x32xf32, #tpu.memory_space<vmem>>, %arg2: memref<32x128xf32, #tpu.memory_space<vmem>>, %arg3: memref<1x128xf32, #tpu.memory_space<vmem>>, %arg4: memref<128x1xf32, #tpu.memory_space<vmem>>, %arg5: memref<1xf32, #tpu.memory_space<smem>>, %arg6: memref<8x1xf32, #tpu.memory_space<vmem>>) attributes {dimension_semantics = [#tpu.dimension_semantics<parallel>], iteration_bounds = array<i64: 1>, scalar_prefetch = 0 : i64, scratch_operands = 0 : i64, tpu.core_type = #tpu.core_type<tc>, window_params = [{transform_indices = @transform_0, window_bounds = array<i64: 8, 32>}, {pipeline_mode = #tpu.pipeline_mode<synchronous>, transform_indices = @transform_1, window_bounds = array<i64: 32, 128>}, {pipeline_mode = #tpu.pipeline_mode<synchronous>, transform_indices = @transform_2, window_bounds = array<i64: 1, 128>}, {pipeline_mode = #tpu.pipeline_mode<synchronous>, transform_indices = @transform_3, window_bounds = array<i64: 128, 1>}, {transform_indices = @transform_4, window_bounds = array<i64: 1>}, {transform_indices = @transform_5, window_bounds = array<i64: 8, 1>}]} {
    %c0 = arith.constant 0 : index
    %c0_0 = arith.constant 0 : index
    %0 = vector.load %arg1[%c0, %c0_0] : memref<8x32xf32, #tpu.memory_space<vmem>>, vector<8x32xf32>
    %c0_1 = arith.constant 0 : index
    %c0_2 = arith.constant 0 : index
    %1 = vector.load %arg2[%c0_1, %c0_2] : memref<32x128xf32, #tpu.memory_space<vmem>>, vector<32x128xf32>
    %cst = arith.constant dense<0.000000e+00> : vector<8x128xf32>
    %2 = tpu.matmul %0, %1, %cst {dimension_numbers = #tpu.dot_dimension_numbers<[1], [0], [0], [1], [0, 0, 1, 1], [], []>} : vector<8x32xf32>, vector<32x128xf32>, vector<8x128xf32> -> vector<8x128xf32>
    %c0_3 = arith.constant 0 : index
    %c0_4 = arith.constant 0 : index
    %3 = vector.load %arg3[%c0_3, %c0_4] : memref<1x128xf32, #tpu.memory_space<vmem>>, vector<1x128xf32>
    %4 = vector.broadcast %3 : vector<1x128xf32> to vector<8x128xf32>
    %5 = arith.addf %2, %4 : vector<8x128xf32>
    %cst_5 = arith.constant 0.000000e+00 : f32
    %6 = vector.broadcast %cst_5 : f32 to vector<8x128xf32>
    %7 = arith.maximumf %5, %6 : vector<8x128xf32>
    %c0_6 = arith.constant 0 : index
    %c0_7 = arith.constant 0 : index
    %8 = vector.load %arg4[%c0_6, %c0_7] : memref<128x1xf32, #tpu.memory_space<vmem>>, vector<128x1xf32>
    %cst_8 = arith.constant dense<0.000000e+00> : vector<8x1xf32>
    %9 = tpu.matmul %7, %8, %cst_8 {dimension_numbers = #tpu.dot_dimension_numbers<[1], [0], [0], [1], [0, 0, 1, 1], [], []>} : vector<8x128xf32>, vector<128x1xf32>, vector<8x1xf32> -> vector<8x1xf32>
    %c0_9 = arith.constant 0 : index
    %10 = memref.load %arg5[%c0_9] : memref<1xf32, #tpu.memory_space<smem>>
    %11 = vector.broadcast %10 : f32 to vector<8x1xf32>
    %12 = arith.addf %9, %11 : vector<8x1xf32>
    %13 = arith.negf %12 : vector<8x1xf32>
    %14 = math.exp %13 : vector<8x1xf32>
    %cst_10 = arith.constant 1.000000e+00 : f32
    %15 = vector.broadcast %cst_10 : f32 to vector<8x1xf32>
    %16 = arith.addf %15, %14 : vector<8x1xf32>
    %17 = arith.divf %15, %16 : vector<8x1xf32>
    %c0_11 = arith.constant 0 : index
    %c0_12 = arith.constant 0 : index
    %18 = vector.load %arg6[%c0_11, %c0_12] : memref<8x1xf32, #tpu.memory_space<vmem>>, vector<8x1xf32>
    tpu.vector_store %arg6[%c0_11, %c0_12], %17 {strides = array<i32>} : memref<8x1xf32, #tpu.memory_space<vmem>>, vector<8x1xf32>,
    return
  }
  func.func @transform_0(%arg0: i32) -> (i32, i32) {
    %c0_i32 = arith.constant 0 : i32
    %c0_i32_0 = arith.constant 0 : i32
    return %arg0, %c0_i32 : i32, i32
  }
  func.func @transform_1(%arg0: i32) -> (i32, i32) {
    %c0_i32 = arith.constant 0 : i32
    %c0_i32_0 = arith.constant 0 : i32
    %c0_i32_1 = arith.constant 0 : i32
    return %c0_i32, %c0_i32_0 : i32, i32
  }
  func.func @transform_2(%arg0: i32) -> (i32, i32) {
    %c0_i32 = arith.constant 0 : i32
    %c0_i32_0 = arith.constant 0 : i32
    %c0_i32_1 = arith.constant 0 : i32
    return %c0_i32, %c0_i32_0 : i32, i32
  }
  func.func @transform_3(%arg0: i32) -> (i32, i32) {
    %c0_i32 = arith.constant 0 : i32
    %c0_i32_0 = arith.constant 0 : i32
    %c0_i32_1 = arith.constant 0 : i32
    return %c0_i32, %c0_i32_0 : i32, i32
  }
  func.func @transform_4(%arg0: i32) -> i32 {
    %c0_i32 = arith.constant 0 : i32
    %c0_i32_0 = arith.constant 0 : i32
    return %c0_i32 : i32
  }
  func.func @transform_5(%arg0: i32) -> (i32, i32) {
    %c0_i32 = arith.constant 0 : i32
    %c0_i32_0 = arith.constant 0 : i32
    return %arg0, %c0_i32 : i32, i32
  }
}

</mosaic_0001>

<llo_original>
// kernel: binary_classifier_forward.1
$region0: #{binary_classifier_forward.1}
  #allocation0 [shape = 'u32[]', space=smem, size = 0x4, offset = 0x4, fixed_abs, tag = 'smem constant byte address 0x4 - core index']
  #allocation1 [shape = 'u32[72,128]{1,0:T(1,128)}', space=vmem, size = 0x9000, scoped, tag = 'internal scratch']
  #allocation2 [shape = 'f32[1]{0:T(128)S(6)}', space=smem, size = 0x200, scoped, tag = 'scoped memory for binary_classifier_forward.1']
  %s0 = inlined_call_operand.vmem [shape: f32[8,32], index: 0, kind: input, shape index: {}]
  %s1 = inlined_call_operand.vmem [shape: f32[32,128], index: 1, kind: input, shape index: {}]
  %s2 = inlined_call_operand.vmem [shape: f32[1,128], index: 2, kind: input, shape index: {}]
  %s3 = inlined_call_operand.vmem [shape: f32[128,1], index: 3, kind: input, shape index: {}]
  %s4 = inlined_call_operand.<no memory space> [shape: f32[1], index: 4, kind: input, shape index: {}]
  %s5 = inlined_call_operand.vmem [shape: f32[8,1], index: 5, kind: output, shape index: {}]
  %s6 = sld [smem:[#allocation0]]
  $region30: #{binary_classifier_forward.1} parent=0
    _
  %s8 = ssub.s32 1, %s6
  %s9 = scalar_select 0, %s8, %s6
  %10 = sst [smem:[#allocation2]] %s4
  // Predicated region
  $region2: #{binary_classifier_forward.1} parent=0 // pred_check
    _
  $region3: #{binary_classifier_forward.1} parent=0 // pred_check_branch
    %12 = sbr.rel (0) target = $region5
  $region4: #{binary_classifier_forward.1} parent=0 // pred_region
    _
  $region5: #{binary_classifier_forward.1} parent=0 // pred_fallthru
    _
  // Predicated region
  $region6: #{binary_classifier_forward.1} parent=0 // pred_check
    _
  $region7: #{binary_classifier_forward.1} parent=0 // pred_check_branch
    %14 = sbr.rel (0) target = $region9
  $region8: #{binary_classifier_forward.1} parent=0 // pred_region
    _
  $region9: #{binary_classifier_forward.1} parent=0 // pred_fallthru
    _
  // Predicated region
  $region10: #{binary_classifier_forward.1} parent=0 // pred_check
    _
  $region11: #{binary_classifier_forward.1} parent=0 // pred_check_branch
    %16 = sbr.rel (0) target = $region13
  $region12: #{binary_classifier_forward.1} parent=0 // pred_region
    _
  $region13: #{binary_classifier_forward.1} parent=0 // pred_fallthru
    _
  // Predicated region
  $region14: #{binary_classifier_forward.1} parent=0 // pred_check
    _
  $region15: #{binary_classifier_forward.1} parent=0 // pred_check_branch
    %18 = sbr.rel (0) target = $region17
  $region16: #{binary_classifier_forward.1} parent=0 // pred_region
    _
  $region17: #{binary_classifier_forward.1} parent=0 // pred_fallthru
    _
  // Predicated region
  $region18: #{binary_classifier_forward.1} parent=0 // pred_check
    _
  $region19: #{binary_classifier_forward.1} parent=0 // pred_check_branch
    %20 = sbr.rel (0) target = $region21
  $region20: #{binary_classifier_forward.1} parent=0 // pred_region
    _
  $region21: #{binary_classifier_forward.1} parent=0 // pred_fallthru
    _
  %v21 = vld [vmem:[%s0] sm:$0xff]
  %v22 = vld [vmem:[%s1] sm:$0xff]
  %v23 = vld [vmem:[%s1 + $0x8] sm:$0xff]
  %v24 = vld [vmem:[%s1 + $0x10] sm:$0xff]
  %v25 = vld [vmem:[%s1 + $0x18] sm:$0xff]
  %v26 = vld [vmem:[%s2] sm:$0x1]
  %v28 = vperm.slane %v26, 0
  %vm30 = vcmask 261120
  %v32 = vsel %vm30, %v21, 0
  %34 = vmatpush.msra.mxu0 0.0
  %35 = vmatpush.msra.mxu0 0.0
  %36 = vmatpush.msra.mxu0 0.0
  %37 = vmatpush.msra.mxu0 0.0
  %38 = vmatpush.msra.mxu0 0.0
  %39 = vmatpush.msra.mxu0 0.0
  %40 = vmatpush.msra.mxu0 0.0
  %41 = vmatpush.msra.mxu0 0.0
  %42 = vmatpush.msra.mxu0 0.0
  %43 = vmatpush.msra.mxu0 0.0
  %44 = vmatpush.msra.mxu0 0.0
  %45 = vmatpush.msra.mxu0 0.0
  %46 = vmatpush.msra.mxu0 %v25
  %47 = vmatpush.msra.mxu0 %v24
  %48 = vmatpush.msra.mxu0 %v23
  %49 = vmatpush.msra.mxu0 %v22
  %50 = vmatmul.f32.gmra.mxu0 %v32
  %v51 = vpop.f32.mrf.mxu0
  %v52 = vadd.f32 %v28, %v51
  %53 = vdwg.mxu0
  %v54 = vmax.f32 %v52, 0.0
  %v55 = vld [vmem:[%s3] sm:$0xff]
  %v56 = vld [vmem:[%s3 + $0x8] sm:$0xff]
  %v57 = vld [vmem:[%s3 + $0x10] sm:$0xff]
  %v58 = vld [vmem:[%s3 + $0x18] sm:$0xff]
  %v59 = vld [vmem:[%s3 + $0x20] sm:$0xff]
  %v60 = vld [vmem:[%s3 + $0x28] sm:$0xff]
  %v61 = vld [vmem:[%s3 + $0x30] sm:$0xff]
  %v62 = vld [vmem:[%s3 + $0x38] sm:$0xff]
  %v63 = vld [vmem:[%s3 + $0x40] sm:$0xff]
  %v64 = vld [vmem:[%s3 + $0x48] sm:$0xff]
  %v65 = vld [vmem:[%s3 + $0x50] sm:$0xff]
  %v66 = vld [vmem:[%s3 + $0x58] sm:$0xff]
  %v67 = vld [vmem:[%s3 + $0x60] sm:$0xff]
  %v68 = vld [vmem:[%s3 + $0x68] sm:$0xff]
  %v69 = vld [vmem:[%s3 + $0x70] sm:$0xff]
  %v70 = vld [vmem:[%s3 + $0x78] sm:$0xff]
  %s71 = sld [smem:[#allocation2]]
  %v72 = vstv %s71
  %73 = vmatpush.msra.mxu0 %v70
  %74 = vmatpush.msra.mxu0 %v69
  %75 = vmatpush.msra.mxu0 %v68
  %76 = vmatpush.msra.mxu0 %v67
  %77 = vmatpush.msra.mxu0 %v66
  %78 = vmatpush.msra.mxu0 %v65
  %79 = vmatpush.msra.mxu0 %v64
  %80 = vmatpush.msra.mxu0 %v63
  %81 = vmatpush.msra.mxu0 %v62
  %82 = vmatpush.msra.mxu0 %v61
  %83 = vmatpush.msra.mxu0 %v60
  %84 = vmatpush.msra.mxu0 %v59
  %85 = vmatpush.msra.mxu0 %v58
  %86 = vmatpush.msra.mxu0 %v57
  %87 = vmatpush.msra.mxu0 %v56
  %88 = vmatpush.msra.mxu0 %v55
  %89 = vmatmul.f32.gmra.mxu0 %v54
  %v90 = vpop.f32.mrf.mxu0
  %v91 = vadd.f32 %v72, %v90
  %92 = vdwg.mxu0
  %v93 = vxor.u32 %v91, 2147483648
  %v94 = vmul.f32 %v93, 1.442695
  %v95 = vpow.pop %v94
  %v96 = vadd.f32 %v95, 1.0
  %v97 = vrcp.pop %v96
  %v98 = vmul.f32 %v96, %v97
  %v99 = vsub.f32 1.0, %v98
  %v100 = vmul.f32 %v97, %v99
  %v101 = vadd.f32 %v97, %v100
  %vm102 = vweird.f32 %v96
  %vm103 = vweird.f32 %v97
  %vm104 = vmor %vm102, %vm103
  %v105 = vsel %vm104, %v97, %v101
  %v106 = vand.u32 2147483647, %v96
  %vm107 = vcmp.eq.f32.partialorder %v106, 8.507059e+37
  %v108 = vand.u32 %v96, 2147483648
  %v109 = vor.u32 1.1754944e-38, %v108
  %v110 = vsel %vm107, %v109, %v105
  %v111 = vmul.f32 1.0, %v110
  %vm112 = vcmask 7168
  %113 = vst.msk [vmem:[%s5] sm:$0xff] %vm112, %v111
  // Predicated region
  $region22: #{binary_classifier_forward.1} parent=0 // pred_check
    _
  $region23: #{binary_classifier_forward.1} parent=0 // pred_check_branch
    %115 = sbr.rel (0) target = $region25
  $region24: #{binary_classifier_forward.1} parent=0 // pred_region
    _
  $region25: #{binary_classifier_forward.1} parent=0 // pred_fallthru
    _
  // Predicated region
  $region26: #{binary_classifier_forward.1} parent=0 // pred_check
    _
  $region27: #{binary_classifier_forward.1} parent=0 // pred_check_branch
    %117 = sbr.rel (0) target = $region29
  $region28: #{binary_classifier_forward.1} parent=0 // pred_region
    _
  $region29: #{binary_classifier_forward.1} parent=0 // pred_fallthru
    _

</llo_original>
